<compile_context>
chip_gen: v6e
topology: v6e:2x2x1
jax: 0.10.0
libtpu: 0.0.40
codegen_flags: <defaults>
</compile_context>

<pallas_src>
import functools

import jax
import jax.numpy as jnp
from jax.experimental import pallas as pl
from jax.experimental.pallas import tpu as pltpu

# The original code references an external `state_mapping`; define the column
# layout here (any C >= 5 works, indices just have to be consistent).
STATE_MAPPING = {
    "pot": 0,
    "amount_to_call": 1,
    "previous_amount": 2,
    "previous_action": 3,    # int in [0, 12), 0 is padding
    "previous_position": 4,  # int in [0, 7),  0 is padding
}

_NEG_SLOPE = 0.01   # PyTorch nn.LeakyReLU default
_M_POSITIONS = 24   # 456 = 24 * (3 scalars + 8 action emb + 8 position emb)


def _round_up(x, m):
    return ((x + m - 1) // m) * m


def _pad2d(a, rows, cols):
    r, c = a.shape
    return jnp.pad(a, ((0, rows - r), (0, cols - c)))


# --------------------------------------------------------------------------
# Pallas kernel: fused 4-layer MLP with LeakyReLU.
#   x_ref   : (tb, 512)      bf16   row tile of assembled features
#   w1_ref  : (512, 128)     bf16
#   wstk_ref: (3, 128, 128)  bf16   stacked W2, W3, W4 (padded)
#   bstk_ref: (4, 128)       f32    stacked b1..b4 (padded)
#   o_ref   : (tb, 128)      bf16   (first 11 lanes are the real logits)
# --------------------------------------------------------------------------
def _mlp_kernel(x_ref, w1_ref, wstk_ref, bstk_ref, o_ref):
    def lrelu(h):  # f32 VPU math (v5e-safe); single max instead of cmp+select
        return jnp.maximum(h, _NEG_SLOPE * h)

    b = bstk_ref[...]                                            # (4, 128) f32
    x = x_ref[...]                                               # (tb, 512) bf16
    h = jnp.dot(x, w1_ref[...], preferred_element_type=jnp.float32)
    h = lrelu(h + b[0:1, :])                                     # (tb, 128) f32
    h = jnp.dot(h.astype(jnp.bfloat16), wstk_ref[0],
                preferred_element_type=jnp.float32)
    h = lrelu(h + b[1:2, :])                                     # (tb, 128)
    h = jnp.dot(h.astype(jnp.bfloat16), wstk_ref[1],
                preferred_element_type=jnp.float32)
    h = lrelu(h + b[2:3, :])                                     # (tb, 128) (64 real)
    y = jnp.dot(h.astype(jnp.bfloat16), wstk_ref[2],
                preferred_element_type=jnp.float32)
    o_ref[...] = (y + b[3:4, :]).astype(o_ref.dtype)             # (tb, 128) (11 real)


# --------------------------------------------------------------------------
# Feature assembly (wrapper side): gather + embedding lookup + concat.
# Fused version builds the padded bf16 slab directly (no f32 x round-trip).
# --------------------------------------------------------------------------
def _split_state(state):
    pot = state[:, :, STATE_MAPPING["pot"]]
    call = state[:, :, STATE_MAPPING["amount_to_call"]]
    prev = state[:, :, STATE_MAPPING["previous_amount"]]
    a_idx = state[:, :, STATE_MAPPING["previous_action"]].astype(jnp.int32)
    p_idx = state[:, :, STATE_MAPPING["previous_position"]].astype(jnp.int32)
    return pot, call, prev, a_idx, p_idx


def assemble_features(state, emb_action, emb_position):
    """Reference path: (B, 24, C) -> (B, 456) f32."""
    B, M, _ = state.shape
    pot, call, prev, a_idx, p_idx = _split_state(state)
    act = jnp.take(emb_action, a_idx, axis=0)        # (B, M, 8)
    pos = jnp.take(emb_position, p_idx, axis=0)      # (B, M, 8)
    x = jnp.concatenate(
        [pot[..., None], call[..., None], prev[..., None], act, pos], axis=-1)
    return x.reshape(B, M * 19).astype(jnp.float32)  # (B, 456)


def _assemble_padded_bf16(state, emb_action, emb_position, Bp, K1):
    """Kernel path: (B, 24, C) -> (Bp, K1) bf16, zero-padded, in one fused pass."""
    B, M, _ = state.shape
    pot, call, prev, a_idx, p_idx = _split_state(state)
    act = jnp.take(emb_action.astype(jnp.bfloat16), a_idx, axis=0)     # (B, M, 8)
    pos = jnp.take(emb_position.astype(jnp.bfloat16), p_idx, axis=0)   # (B, M, 8)
    x = jnp.concatenate(
        [pot[..., None].astype(jnp.bfloat16),
         call[..., None].astype(jnp.bfloat16),
         prev[..., None].astype(jnp.bfloat16),
         act, pos], axis=-1)                                           # (B, M, 19)
    x = x.reshape(B, M * 19)                                           # (B, 456) bf16
    return jnp.pad(x, ((0, Bp - B), (0, K1 - M * 19)))                 # (Bp, K1)


# --------------------------------------------------------------------------
# Forward pass
# --------------------------------------------------------------------------
@functools.partial(jax.jit, static_argnames=("tm",))
def simple_forward(state, params, *, tm=1024):
    """state: (B, 24, C) float32. Returns (B, 11) float32 logits."""
    (w1, b1, w2, b2, w3, b3, w4, b4, emb_action, emb_position) = params
    B, M, _ = state.shape
    assert M * 19 == w1.shape[0], "state positions must match Linear(456, ...)"

    # Lane-dense padded dims (exact: zero padding on K/N, LeakyReLU(0)=0).
    K1 = _round_up(w1.shape[0], 128)   # 456 -> 512
    N1 = _round_up(w1.shape[1], 128)   # 128
    N2 = _round_up(w2.shape[1], 128)   # 128
    N3 = _round_up(w3.shape[1], 128)   # 64  -> 128
    N4 = _round_up(w4.shape[1], 128)   # 11  -> 128
    assert N1 == N2 == N3 == N4, "stacked-weight path assumes equal padded N"
    N = N1

    # Row tile: big by default, multiples of 16 (bf16 sublane tile), and the
    # grid gets >= 2 steps whenever the padded batch allows so both v7x
    # TensorCores have work under dimension_semantics=("parallel",).
    tm = _round_up(max(int(tm), 16), 16)
    Bp0 = _round_up(B, 16)
    if Bp0 >= 32:
        tb = min(tm, _round_up(Bp0 // 2, 16))
    else:
        tb = Bp0
    Bp = _round_up(B, tb)
    grid = (Bp // tb,)

    # Assembled, padded, bf16 activation slab (single fused pass under jit).
    xp = _assemble_padded_bf16(state, emb_action, emb_position, Bp, K1)

    # bf16 operands for the MXU; biases stay f32 (activation math is f32).
    w1p = _pad2d(w1, K1, N).astype(jnp.bfloat16)                  # (512, 128)
    wstk = jnp.stack([_pad2d(w2, N, N), _pad2d(w3, N, N),
                      _pad2d(w4, N, N)]).astype(jnp.bfloat16)     # (3, 128, 128)
    bstk = jnp.stack([jnp.pad(b1, (0, N - b1.shape[0])),
                      jnp.pad(b2, (0, N - b2.shape[0])),
                      jnp.pad(b3, (0, N - b3.shape[0])),
                      jnp.pad(b4, (0, N - b4.shape[0]))]).astype(jnp.float32)  # (4,128)

    flops = 2 * Bp * (K1 * N + 3 * N * N)
    bytes_accessed = (xp.size * 2            # bf16 activation read
                      + w1p.size * 2 + wstk.size * 2
                      + bstk.size * 4
                      + Bp * N * 2)          # bf16 output write

    out_padded = pl.pallas_call(
        _mlp_kernel,
        out_shape=jax.ShapeDtypeStruct((Bp, N), jnp.bfloat16),
        grid_spec=pltpu.PrefetchScalarGridSpec(
            num_scalar_prefetch=0,
            grid=grid,
            in_specs=[
                pl.BlockSpec((tb, K1), lambda i: (i, 0)),        # x row tile
                pl.BlockSpec((K1, N), lambda i: (0, 0)),         # W1
                pl.BlockSpec((3, N, N), lambda i: (0, 0, 0)),    # W2,W3,W4
                pl.BlockSpec((4, N), lambda i: (0, 0)),          # b1..b4
            ],
            out_specs=pl.BlockSpec((tb, N), lambda i: (i, 0)),
        ),
        compiler_params=pltpu.CompilerParams(
            dimension_semantics=("parallel",),
            # Keeps large row tiles (tb up to ~2048) safe on v5e's 16 MiB
            # scoped-VMEM default; well under v7x's 64 MiB physical VMEM.
            vmem_limit_bytes=48 * 1024 * 1024),
        cost_estimate=pl.CostEstimate(
            flops=int(flops), transcendentals=0,
            bytes_accessed=int(bytes_accessed)),
    )(xp, w1p, wstk, bstk)

    return out_padded[:B, :w4.shape[1]].astype(jnp.float32)      # (B, 11)


# --------------------------------------------------------------------------
# Parameter init matching the PyTorch module (weights pre-transposed to (in, out)).
# --------------------------------------------------------------------------
def init_params(key):
    n_in, h1, h2, h3, n_out = 456, 128, 128, 64, 11
    ks = jax.random.split(key, 10)

    def linear(kw, kb, fan_in, fan_out):
        lim = 1.0 / (fan_in ** 0.5)     # PyTorch Linear default U(+-1/sqrt(fan_in))
        w = jax.random.uniform(kw, (fan_in, fan_out), jnp.float32, -lim, lim)
        b = jax.random.uniform(kb, (fan_out,), jnp.float32, -lim, lim)
        return w, b

    w1, b1 = linear(ks[0], ks[1], n_in, h1)
    w2, b2 = linear(ks[2], ks[3], h1, h2)
    w3, b3 = linear(ks[4], ks[5], h2, h3)
    w4, b4 = linear(ks[6], ks[7], h3, n_out)
    # nn.Embedding default N(0,1); padding_idx=0 row is zeroed.
    emb_action = jax.random.normal(ks[8], (12, 8), jnp.float32).at[0].set(0.0)
    emb_position = jax.random.normal(ks[9], (7, 8), jnp.float32).at[0].set(0.0)
    return (w1, b1, w2, b2, w3, b3, w4, b4, emb_action, emb_position)


# --------------------------------------------------------------------------
# Pure-JAX f32 reference (module semantics).
# --------------------------------------------------------------------------
def reference(state, params):
    (w1, b1, w2, b2, w3, b3, w4, b4, ea, ep) = params
    x = assemble_features(state, ea, ep)

    def lrelu(h):
        return jnp.where(h > 0.0, h, _NEG_SLOPE * h)

    h = lrelu(x @ w1 + b1)
    h = lrelu(h @ w2 + b2)
    h = lrelu(h @ w3 + b3)
    return h @ w4 + b4


if __name__ == "__main__":
    B, M, C = 4, _M_POSITIONS, 8          # 24 positions -> 24*19 = 456 features

    key = jax.random.PRNGKey(0)
    kf, ka, kp, kparam = jax.random.split(key, 4)
    floats = jax.random.normal(kf, (B, M, C), jnp.float32)
    a_idx = jax.random.randint(ka, (B, M), 0, 12)
    p_idx = jax.random.randint(kp, (B, M), 0, 7)
    state = floats.at[:, :, STATE_MAPPING["previous_action"]].set(
        a_idx.astype(jnp.float32))
    state = state.at[:, :, STATE_MAPPING["previous_position"]].set(
        p_idx.astype(jnp.float32))

    params = init_params(kparam)

    out = simple_forward(state, params)
    out = jax.block_until_ready(out)

    ref = reference(state, params)
    assert out.shape == (B, 11), out.shape
    # bf16 MXU operands / bf16 output with f32 accumulation: tolerance covers
    # bf16 rounding.
    assert jnp.allclose(out, ref, atol=5e-2, rtol=5e-2), \
        float(jnp.max(jnp.abs(out - ref)))

    print("KERNEL_OK")
</pallas_src>

<mosaic_0001>
module attributes {stable_mosaic.version = 11 : i64} {
  func.func @_mlp_kernel(%arg0: i32, %arg1: memref<16x512xbf16, #tpu.memory_space<vmem>>, %arg2: memref<512x128xbf16, #tpu.memory_space<vmem>>, %arg3: memref<3x128x128xbf16, #tpu.memory_space<vmem>>, %arg4: memref<4x128xf32, #tpu.memory_space<vmem>>, %arg5: memref<16x128xbf16, #tpu.memory_space<vmem>>) attributes {dimension_semantics = [#tpu.dimension_semantics<parallel>], iteration_bounds = array<i64: 1>, scalar_prefetch = 0 : i64, scratch_operands = 0 : i64, tpu.core_type = #tpu.core_type<tc>, window_params = [{transform_indices = @transform_0, window_bounds = array<i64: 16, 512>}, {pipeline_mode = #tpu.pipeline_mode<synchronous>, transform_indices = @transform_1, window_bounds = array<i64: 512, 128>}, {pipeline_mode = #tpu.pipeline_mode<synchronous>, transform_indices = @transform_2, window_bounds = array<i64: 3, 128, 128>}, {pipeline_mode = #tpu.pipeline_mode<synchronous>, transform_indices = @transform_3, window_bounds = array<i64: 4, 128>}, {transform_indices = @transform_4, window_bounds = array<i64: 16, 128>}]} {
    %c0 = arith.constant 0 : index
    %c0_0 = arith.constant 0 : index
    %0 = vector.load %arg4[%c0, %c0_0] : memref<4x128xf32, #tpu.memory_space<vmem>>, vector<4x128xf32>
    %c0_1 = arith.constant 0 : index
    %c0_2 = arith.constant 0 : index
    %1 = vector.load %arg1[%c0_1, %c0_2] : memref<16x512xbf16, #tpu.memory_space<vmem>>, vector<16x512xbf16>
    %c0_3 = arith.constant 0 : index
    %c0_4 = arith.constant 0 : index
    %2 = vector.load %arg2[%c0_3, %c0_4] : memref<512x128xbf16, #tpu.memory_space<vmem>>, vector<512x128xbf16>
    %cst = arith.constant dense<0.000000e+00> : vector<16x128xf32>
    %3 = tpu.matmul %1, %2, %cst {dimension_numbers = #tpu.dot_dimension_numbers<[1], [0], [0], [1], [0, 0, 1, 1], [], []>} : vector<16x512xbf16>, vector<512x128xbf16>, vector<16x128xf32> -> vector<16x128xf32>
    %4 = vector.extract_strided_slice %0 {offsets = [0, 0], sizes = [1, 128], strides = [1, 1]} : vector<4x128xf32> to vector<1x128xf32>
    %5 = vector.broadcast %4 : vector<1x128xf32> to vector<16x128xf32>
    %6 = arith.addf %3, %5 : vector<16x128xf32>
    %cst_5 = arith.constant 0.00999999977 : f32
    %7 = vector.broadcast %cst_5 : f32 to vector<16x128xf32>
    %8 = arith.mulf %7, %6 : vector<16x128xf32>
    %9 = arith.maximumf %6, %8 : vector<16x128xf32>
    %10 = arith.truncf %9 : vector<16x128xf32> to vector<16x128xbf16>
    %c0_6 = arith.constant 0 : index
    %c0_7 = arith.constant 0 : index
    %c0_8 = arith.constant 0 : index
    %11 = vector.load %arg3[%c0_6, %c0_7, %c0_8] : memref<3x128x128xbf16, #tpu.memory_space<vmem>>, vector<1x128x128xbf16>
    %12 = vector.shape_cast %11 : vector<1x128x128xbf16> to vector<128x128xbf16>
    %cst_9 = arith.constant dense<0.000000e+00> : vector<16x128xf32>
    %13 = tpu.matmul %10, %12, %cst_9 {dimension_numbers = #tpu.dot_dimension_numbers<[1], [0], [0], [1], [0, 0, 1, 1], [], []>} : vector<16x128xbf16>, vector<128x128xbf16>, vector<16x128xf32> -> vector<16x128xf32>
    %14 = vector.extract_strided_slice %0 {offsets = [1, 0], sizes = [1, 128], strides = [1, 1]} : vector<4x128xf32> to vector<1x128xf32>
    %15 = vector.broadcast %14 : vector<1x128xf32> to vector<16x128xf32>
    %16 = arith.addf %13, %15 : vector<16x128xf32>
    %cst_10 = arith.constant 0.00999999977 : f32
    %17 = vector.broadcast %cst_10 : f32 to vector<16x128xf32>
    %18 = arith.mulf %17, %16 : vector<16x128xf32>
    %19 = arith.maximumf %16, %18 : vector<16x128xf32>
    %20 = arith.truncf %19 : vector<16x128xf32> to vector<16x128xbf16>
    %c1 = arith.constant 1 : index
    %c0_11 = arith.constant 0 : index
    %c0_12 = arith.constant 0 : index
    %21 = vector.load %arg3[%c1, %c0_11, %c0_12] : memref<3x128x128xbf16, #tpu.memory_space<vmem>>, vector<1x128x128xbf16>
    %22 = vector.shape_cast %21 : vector<1x128x128xbf16> to vector<128x128xbf16>
    %cst_13 = arith.constant dense<0.000000e+00> : vector<16x128xf32>
    %23 = tpu.matmul %20, %22, %cst_13 {dimension_numbers = #tpu.dot_dimension_numbers<[1], [0], [0], [1], [0, 0, 1, 1], [], []>} : vector<16x128xbf16>, vector<128x128xbf16>, vector<16x128xf32> -> vector<16x128xf32>
    %24 = vector.extract_strided_slice %0 {offsets = [2, 0], sizes = [1, 128], strides = [1, 1]} : vector<4x128xf32> to vector<1x128xf32>
    %25 = vector.broadcast %24 : vector<1x128xf32> to vector<16x128xf32>
    %26 = arith.addf %23, %25 : vector<16x128xf32>
    %cst_14 = arith.constant 0.00999999977 : f32
    %27 = vector.broadcast %cst_14 : f32 to vector<16x128xf32>
    %28 = arith.mulf %27, %26 : vector<16x128xf32>
    %29 = arith.maximumf %26, %28 : vector<16x128xf32>
    %30 = arith.truncf %29 : vector<16x128xf32> to vector<16x128xbf16>
    %c2 = arith.constant 2 : index
    %c0_15 = arith.constant 0 : index
    %c0_16 = arith.constant 0 : index
    %31 = vector.load %arg3[%c2, %c0_15, %c0_16] : memref<3x128x128xbf16, #tpu.memory_space<vmem>>, vector<1x128x128xbf16>
    %32 = vector.shape_cast %31 : vector<1x128x128xbf16> to vector<128x128xbf16>
    %cst_17 = arith.constant dense<0.000000e+00> : vector<16x128xf32>
    %33 = tpu.matmul %30, %32, %cst_17 {dimension_numbers = #tpu.dot_dimension_numbers<[1], [0], [0], [1], [0, 0, 1, 1], [], []>} : vector<16x128xbf16>, vector<128x128xbf16>, vector<16x128xf32> -> vector<16x128xf32>
    %34 = vector.extract_strided_slice %0 {offsets = [3, 0], sizes = [1, 128], strides = [1, 1]} : vector<4x128xf32> to vector<1x128xf32>
    %35 = vector.broadcast %34 : vector<1x128xf32> to vector<16x128xf32>
    %36 = arith.addf %33, %35 : vector<16x128xf32>
    %37 = arith.truncf %36 : vector<16x128xf32> to vector<16x128xbf16>
    %c0_18 = arith.constant 0 : index
    %c0_19 = arith.constant 0 : index
    %38 = vector.load %arg5[%c0_18, %c0_19] : memref<16x128xbf16, #tpu.memory_space<vmem>>, vector<16x128xbf16>
    tpu.vector_store %arg5[%c0_18, %c0_19], %37 {strides = array<i32>} : memref<16x128xbf16, #tpu.memory_space<vmem>>, vector<16x128xbf16>,
    return
  }
  func.func @transform_0(%arg0: i32) -> (i32, i32) {
    %c0_i32 = arith.constant 0 : i32
    %c0_i32_0 = arith.constant 0 : i32
    return %arg0, %c0_i32 : i32, i32
  }
  func.func @transform_1(%arg0: i32) -> (i32, i32) {
    %c0_i32 = arith.constant 0 : i32
    %c0_i32_0 = arith.constant 0 : i32
    %c0_i32_1 = arith.constant 0 : i32
    return %c0_i32, %c0_i32_0 : i32, i32
  }
  func.func @transform_2(%arg0: i32) -> (i32, i32, i32) {
    %c0_i32 = arith.constant 0 : i32
    %c0_i32_0 = arith.constant 0 : i32
    %c0_i32_1 = arith.constant 0 : i32
    %c0_i32_2 = arith.constant 0 : i32
    return %c0_i32, %c0_i32_0, %c0_i32_1 : i32, i32, i32
  }
  func.func @transform_3(%arg0: i32) -> (i32, i32) {
    %c0_i32 = arith.constant 0 : i32
    %c0_i32_0 = arith.constant 0 : i32
    %c0_i32_1 = arith.constant 0 : i32
    return %c0_i32, %c0_i32_0 : i32, i32
  }
  func.func @transform_4(%arg0: i32) -> (i32, i32) {
    %c0_i32 = arith.constant 0 : i32
    %c0_i32_0 = arith.constant 0 : i32
    return %arg0, %c0_i32 : i32, i32
  }
}

</mosaic_0001>

<llo_original>
// kernel: simple_forward.1
$region0: #{simple_forward.1}
  #allocation0 [shape = 'u32[]', space=smem, size = 0x4, offset = 0x4, fixed_abs, tag = 'smem constant byte address 0x4 - core index']
  #allocation1 [shape = 'u32[144,128]{1,0:T(1,128)}', space=vmem, size = 0x12000, scoped, tag = 'internal scratch']
  %s0 = inlined_call_operand.vmem [shape: bf16[16,512], index: 0, kind: input, shape index: {}]
  %s1 = inlined_call_operand.vmem [shape: bf16[512,128], index: 1, kind: input, shape index: {}]
  %s2 = inlined_call_operand.vmem [shape: bf16[3,128,128], index: 2, kind: input, shape index: {}]
  %s3 = inlined_call_operand.vmem [shape: f32[4,128], index: 3, kind: input, shape index: {}]
  %s4 = inlined_call_operand.vmem [shape: bf16[16,128], index: 4, kind: output, shape index: {}]
  %s5 = sld [smem:[#allocation0]]
  $region26: #{simple_forward.1} parent=0
    _
  %s7 = ssub.s32 1, %s5
  %s8 = scalar_select 0, %s7, %s5
  // Predicated region
  $region2: #{simple_forward.1} parent=0 // pred_check
    _
  $region3: #{simple_forward.1} parent=0 // pred_check_branch
    %10 = sbr.rel (0) target = $region5
  $region4: #{simple_forward.1} parent=0 // pred_region
    _
  $region5: #{simple_forward.1} parent=0 // pred_fallthru
    _
  // Predicated region
  $region6: #{simple_forward.1} parent=0 // pred_check
    _
  $region7: #{simple_forward.1} parent=0 // pred_check_branch
    %12 = sbr.rel (0) target = $region9
  $region8: #{simple_forward.1} parent=0 // pred_region
    _
  $region9: #{simple_forward.1} parent=0 // pred_fallthru
    _
  // Predicated region
  $region10: #{simple_forward.1} parent=0 // pred_check
    _
  $region11: #{simple_forward.1} parent=0 // pred_check_branch
    %14 = sbr.rel (0) target = $region13
  $region12: #{simple_forward.1} parent=0 // pred_region
    _
  $region13: #{simple_forward.1} parent=0 // pred_fallthru
    _
  // Predicated region
  $region14: #{simple_forward.1} parent=0 // pred_check
    _
  $region15: #{simple_forward.1} parent=0 // pred_check_branch
    %16 = sbr.rel (0) target = $region17
  $region16: #{simple_forward.1} parent=0 // pred_region
    _
  $region17: #{simple_forward.1} parent=0 // pred_fallthru
    _
  %v18 = vld [vmem:[%s3] sm:$0xf]
  %v19 = vld [vmem:[%s0] sm:$0xff]
  %v20 = vld [vmem:[%s0 + $0x8] sm:$0xff]
  %v21 = vld [vmem:[%s0 + $0x10] sm:$0xff]
  %v22 = vld [vmem:[%s0 + $0x18] sm:$0xff]
  %v23 = vld [vmem:[%s1] sm:$0xf]
  %v24 = vld [vmem:[%s1 + $0x4] sm:$0xf]
  %v25 = vld [vmem:[%s1 + $0x8] sm:$0xf]
  %v26 = vld [vmem:[%s1 + $0xc] sm:$0xf]
  %v27 = vld [vmem:[%s1 + $0x10] sm:$0xf]
  %v28 = vld [vmem:[%s1 + $0x14] sm:$0xf]
  %v29 = vld [vmem:[%s1 + $0x18] sm:$0xf]
  %v30 = vld [vmem:[%s1 + $0x1c] sm:$0xf]
  %v31 = vld [vmem:[%s1 + $0x20] sm:$0xf]
  %v32 = vld [vmem:[%s1 + $0x24] sm:$0xf]
  %v33 = vld [vmem:[%s1 + $0x28] sm:$0xf]
  %v34 = vld [vmem:[%s1 + $0x2c] sm:$0xf]
  %v35 = vld [vmem:[%s1 + $0x30] sm:$0xf]
  %v36 = vld [vmem:[%s1 + $0x34] sm:$0xf]
  %v37 = vld [vmem:[%s1 + $0x38] sm:$0xf]
  %v38 = vld [vmem:[%s1 + $0x3c] sm:$0xf]
  %v39 = vld [vmem:[%s1 + $0x40] sm:$0xf]
  %v40 = vld [vmem:[%s1 + $0x44] sm:$0xf]
  %v41 = vld [vmem:[%s1 + $0x48] sm:$0xf]
  %v42 = vld [vmem:[%s1 + $0x4c] sm:$0xf]
  %v43 = vld [vmem:[%s1 + $0x50] sm:$0xf]
  %v44 = vld [vmem:[%s1 + $0x54] sm:$0xf]
  %v45 = vld [vmem:[%s1 + $0x58] sm:$0xf]
  %v46 = vld [vmem:[%s1 + $0x5c] sm:$0xf]
  %v47 = vld [vmem:[%s1 + $0x60] sm:$0xf]
  %v48 = vld [vmem:[%s1 + $0x64] sm:$0xf]
  %v49 = vld [vmem:[%s1 + $0x68] sm:$0xf]
  %v50 = vld [vmem:[%s1 + $0x6c] sm:$0xf]
  %v51 = vld [vmem:[%s1 + $0x70] sm:$0xf]
  %v52 = vld [vmem:[%s1 + $0x74] sm:$0xf]
  %v53 = vld [vmem:[%s1 + $0x78] sm:$0xf]
  %v54 = vld [vmem:[%s1 + $0x7c] sm:$0xf]
  %v55 = vld [vmem:[%s1 + $0x80] sm:$0xf]
  %v56 = vld [vmem:[%s1 + $0x84] sm:$0xf]
  %v57 = vld [vmem:[%s1 + $0x88] sm:$0xf]
  %v58 = vld [vmem:[%s1 + $0x8c] sm:$0xf]
  %v59 = vld [vmem:[%s1 + $0x90] sm:$0xf]
  %v60 = vld [vmem:[%s1 + $0x94] sm:$0xf]
  %v61 = vld [vmem:[%s1 + $0x98] sm:$0xf]
  %v62 = vld [vmem:[%s1 + $0x9c] sm:$0xf]
  %v63 = vld [vmem:[%s1 + $0xa0] sm:$0xf]
  %v64 = vld [vmem:[%s1 + $0xa4] sm:$0xf]
  %v65 = vld [vmem:[%s1 + $0xa8] sm:$0xf]
  %v66 = vld [vmem:[%s1 + $0xac] sm:$0xf]
  %v67 = vld [vmem:[%s1 + $0xb0] sm:$0xf]
  %v68 = vld [vmem:[%s1 + $0xb4] sm:$0xf]
  %v69 = vld [vmem:[%s1 + $0xb8] sm:$0xf]
  %v70 = vld [vmem:[%s1 + $0xbc] sm:$0xf]
  %v71 = vld [vmem:[%s1 + $0xc0] sm:$0xf]
  %v72 = vld [vmem:[%s1 + $0xc4] sm:$0xf]
  %v73 = vld [vmem:[%s1 + $0xc8] sm:$0xf]
  %v74 = vld [vmem:[%s1 + $0xcc] sm:$0xf]
  %v75 = vld [vmem:[%s1 + $0xd0] sm:$0xf]
  %v76 = vld [vmem:[%s1 + $0xd4] sm:$0xf]
  %v77 = vld [vmem:[%s1 + $0xd8] sm:$0xf]
  %v78 = vld [vmem:[%s1 + $0xdc] sm:$0xf]
  %v79 = vld [vmem:[%s1 + $0xe0] sm:$0xf]
  %v80 = vld [vmem:[%s1 + $0xe4] sm:$0xf]
  %v81 = vld [vmem:[%s1 + $0xe8] sm:$0xf]
  %v82 = vld [vmem:[%s1 + $0xec] sm:$0xf]
  %v83 = vld [vmem:[%s1 + $0xf0] sm:$0xf]
  %v84 = vld [vmem:[%s1 + $0xf4] sm:$0xf]
  %v85 = vld [vmem:[%s1 + $0xf8] sm:$0xf]
  %v86 = vld [vmem:[%s1 + $0xfc] sm:$0xf]
  %v87 = vlaneseq
  %v88 = vshrl.u32 %v87, 7
  %v89 = vsub.s32 0, %v88
  %v90 = vrot.slane %v18, %v89
  %v95 = vunpack.c.l.b16 %v19
  %v96 = vunpack.c.h.b16 %v19
  %v97 = vunpack.c.l.b16 %v20
  %v98 = vunpack.c.h.b16 %v20
  %v99 = vunpack.c.l.b16 %v21
  %v100 = vunpack.c.h.b16 %v21
  %v101 = vunpack.c.l.b16 %v22
  %v102 = vunpack.c.h.b16 %v22
  %v103 = vpack.c.b16 %v99, %v95
  %v104 = vpack.c.b16 %v100, %v96
  %v105 = vpack.c.b16 %v101, %v97
  %v106 = vpack.c.b16 %v102, %v98
  %v175 = vunpack.c.l.b16 %v23
  %v176 = vunpack.c.l.b16 %v24
  %v177 = vunpack.c.l.b16 %v25
  %v178 = vunpack.c.l.b16 %v26
  %v179 = vunpack.c.l.b16 %v27
  %v180 = vunpack.c.l.b16 %v28
  %v181 = vunpack.c.l.b16 %v29
  %v182 = vunpack.c.l.b16 %v30
  %v183 = vunpack.c.l.b16 %v31
  %v184 = vunpack.c.l.b16 %v32
  %v185 = vunpack.c.l.b16 %v33
  %v186 = vunpack.c.l.b16 %v34
  %v187 = vunpack.c.l.b16 %v35
  %v188 = vunpack.c.l.b16 %v36
  %v189 = vunpack.c.l.b16 %v37
  %v190 = vunpack.c.l.b16 %v38
  %v191 = vunpack.c.l.b16 %v39
  %v192 = vunpack.c.l.b16 %v40
  %v193 = vunpack.c.l.b16 %v41
  %v194 = vunpack.c.l.b16 %v42
  %v195 = vunpack.c.l.b16 %v43
  %v196 = vunpack.c.l.b16 %v44
  %v197 = vunpack.c.l.b16 %v45
  %v198 = vunpack.c.l.b16 %v46
  %v199 = vunpack.c.l.b16 %v47
  %v200 = vunpack.c.l.b16 %v48
  %v201 = vunpack.c.l.b16 %v49
  %v202 = vunpack.c.l.b16 %v50
  %v203 = vunpack.c.l.b16 %v51
  %v204 = vunpack.c.l.b16 %v52
  %v205 = vunpack.c.l.b16 %v53
  %v206 = vunpack.c.l.b16 %v54
  %v207 = vunpack.c.l.b16 %v55
  %v208 = vunpack.c.l.b16 %v56
  %v209 = vunpack.c.l.b16 %v57
  %v210 = vunpack.c.l.b16 %v58
  %v211 = vunpack.c.l.b16 %v59
  %v212 = vunpack.c.l.b16 %v60
  %v213 = vunpack.c.l.b16 %v61
  %v214 = vunpack.c.l.b16 %v62
  %v215 = vunpack.c.l.b16 %v63
  %v216 = vunpack.c.l.b16 %v64
  %v217 = vunpack.c.l.b16 %v65
  %v218 = vunpack.c.l.b16 %v66
  %v219 = vunpack.c.l.b16 %v67
  %v220 = vunpack.c.l.b16 %v68
  %v221 = vunpack.c.l.b16 %v69
  %v222 = vunpack.c.l.b16 %v70
  %v223 = vunpack.c.l.b16 %v71
  %v224 = vunpack.c.l.b16 %v72
  %v225 = vunpack.c.l.b16 %v73
  %v226 = vunpack.c.l.b16 %v74
  %v227 = vunpack.c.l.b16 %v75
  %v228 = vunpack.c.l.b16 %v76
  %v229 = vunpack.c.l.b16 %v77
  %v230 = vunpack.c.l.b16 %v78
  %v231 = vunpack.c.l.b16 %v79
  %v232 = vunpack.c.l.b16 %v80
  %v233 = vunpack.c.l.b16 %v81
  %v234 = vunpack.c.l.b16 %v82
  %v235 = vunpack.c.l.b16 %v83
  %v236 = vunpack.c.l.b16 %v84
  %v237 = vunpack.c.l.b16 %v85
  %v238 = vunpack.c.l.b16 %v86
  %v239 = vpack.c.b16 %v176, %v175
  %v240 = vpack.c.b16 %v178, %v177
  %v241 = vpack.c.b16 %v180, %v179
  %v242 = vpack.c.b16 %v182, %v181
  %v243 = vpack.c.b16 %v184, %v183
  %v244 = vpack.c.b16 %v186, %v185
  %v245 = vpack.c.b16 %v188, %v187
  %v246 = vpack.c.b16 %v190, %v189
  %v247 = vpack.c.b16 %v192, %v191
  %v248 = vpack.c.b16 %v194, %v193
  %v249 = vpack.c.b16 %v196, %v195
  %v250 = vpack.c.b16 %v198, %v197
  %v251 = vpack.c.b16 %v200, %v199
  %v252 = vpack.c.b16 %v202, %v201
  %v253 = vpack.c.b16 %v204, %v203
  %v254 = vpack.c.b16 %v206, %v205
  %v255 = vpack.c.b16 %v208, %v207
  %v256 = vpack.c.b16 %v210, %v209
  %v257 = vpack.c.b16 %v212, %v211
  %v258 = vpack.c.b16 %v214, %v213
  %v259 = vpack.c.b16 %v216, %v215
  %v260 = vpack.c.b16 %v218, %v217
  %v261 = vpack.c.b16 %v220, %v219
  %v262 = vpack.c.b16 %v222, %v221
  %v263 = vpack.c.b16 %v224, %v223
  %v264 = vpack.c.b16 %v226, %v225
  %v265 = vpack.c.b16 %v228, %v227
  %v266 = vpack.c.b16 %v230, %v229
  %v267 = vpack.c.b16 %v232, %v231
  %v268 = vpack.c.b16 %v234, %v233
  %v269 = vpack.c.b16 %v236, %v235
  %v270 = vpack.c.b16 %v238, %v237
  %303 = vmatprep.subr.bf16.mxu0 0
  %304 = vmatpush1.bf16.msra.mxu0 %v246
  %305 = vmatprep.subr.bf16.mxu0 0
  %306 = vmatpush1.bf16.msra.mxu0 %v245
  %307 = vmatprep.subr.bf16.mxu0 0
  %308 = vmatpush1.bf16.msra.mxu0 %v244
  %309 = vmatprep.subr.bf16.mxu0 0
  %310 = vmatpush1.bf16.msra.mxu0 %v243
  %311 = vmatprep.subr.bf16.mxu0 0
  %312 = vmatpush1.bf16.msra.mxu0 %v242
  %313 = vmatprep.subr.bf16.mxu0 0
  %314 = vmatpush1.bf16.msra.mxu0 %v241
  %315 = vmatprep.subr.bf16.mxu0 0
  %316 = vmatpush1.bf16.msra.mxu0 %v240
  %317 = vmatprep.subr.bf16.mxu0 0
  %318 = vmatpush1.bf16.msra.mxu0 %v239
  %319 = vmatprep.subr.bf16.mxu0 0
  %320 = vmatpush2.bf16.msra.mxu0 %v254
  %321 = vmatprep.subr.bf16.mxu0 0
  %322 = vmatpush2.bf16.msra.mxu0 %v253
  %323 = vmatprep.subr.bf16.mxu0 0
  %324 = vmatpush2.bf16.msra.mxu0 %v252
  %325 = vmatprep.subr.bf16.mxu0 0
  %326 = vmatpush2.bf16.msra.mxu0 %v251
  %327 = vmatprep.subr.bf16.mxu0 0
  %328 = vmatpush2.bf16.msra.mxu0 %v250
  %329 = vmatprep.subr.bf16.mxu0 0
  %330 = vmatpush2.bf16.msra.mxu0 %v249
  %331 = vmatprep.subr.bf16.mxu0 0
  %332 = vmatpush2.bf16.msra.mxu0 %v248
  %333 = vmatprep.subr.bf16.mxu0 0
  %334 = vmatpush2.bf16.msra.mxu0 %v247
  %335 = vmatprep.mubr.bf16.mxu0 %v104
  %336 = vmatmul.mubr.bf16.gmra.mxu0 %v103
  %v337 = vpop.f32.mrf.mxu0
  %v338 = vadd.f32 %v90, %v337
  %v339 = vpop.f32.mrf.mxu0
  %v340 = vpop.f32.mrf.mxu0
  %v341 = vadd.f32 %v90, %v340
  %v342 = vpop.f32.mrf.mxu0
  %343 = vdwg.mxu0
  %344 = vmatprep.subr.bf16.mxu0 0
  %345 = vmatpush1.bf16.msra.mxu0 %v262
  %346 = vmatprep.subr.bf16.mxu0 0
  %347 = vmatpush1.bf16.msra.mxu0 %v261
  %348 = vmatprep.subr.bf16.mxu0 0
  %349 = vmatpush1.bf16.msra.mxu0 %v260
  %350 = vmatprep.subr.bf16.mxu0 0
  %351 = vmatpush1.bf16.msra.mxu0 %v259
  %352 = vmatprep.subr.bf16.mxu0 0
  %353 = vmatpush1.bf16.msra.mxu0 %v258
  %354 = vmatprep.subr.bf16.mxu0 0
  %355 = vmatpush1.bf16.msra.mxu0 %v257
  %356 = vmatprep.subr.bf16.mxu0 0
  %357 = vmatpush1.bf16.msra.mxu0 %v256
  %358 = vmatprep.subr.bf16.mxu0 0
  %359 = vmatpush1.bf16.msra.mxu0 %v255
  %360 = vmatprep.subr.bf16.mxu0 0
  %361 = vmatpush2.bf16.msra.mxu0 %v270
  %362 = vmatprep.subr.bf16.mxu0 0
  %363 = vmatpush2.bf16.msra.mxu0 %v269
  %364 = vmatprep.subr.bf16.mxu0 0
  %365 = vmatpush2.bf16.msra.mxu0 %v268
  %366 = vmatprep.subr.bf16.mxu0 0
  %367 = vmatpush2.bf16.msra.mxu0 %v267
  %368 = vmatprep.subr.bf16.mxu0 0
  %369 = vmatpush2.bf16.msra.mxu0 %v266
  %370 = vmatprep.subr.bf16.mxu0 0
  %371 = vmatpush2.bf16.msra.mxu0 %v265
  %372 = vmatprep.subr.bf16.mxu0 0
  %373 = vmatpush2.bf16.msra.mxu0 %v264
  %374 = vmatprep.subr.bf16.mxu0 0
  %375 = vmatpush2.bf16.msra.mxu0 %v263
  %376 = vmatprep.mubr.bf16.mxu0 %v106
  %377 = vmatmul.mubr.bf16.gmra.mxu0 %v105
  %v378 = vpop.f32.mrf.mxu0
  %v379 = vadd.f32 %v338, %v378
  %v380 = vpop.f32.mrf.mxu0
  %v381 = vpop.f32.mrf.mxu0
  %v382 = vadd.f32 %v341, %v381
  %v383 = vpop.f32.mrf.mxu0
  %384 = vdwg.mxu0
  %v385 = vmul.f32 %v379, 0.01
  %v386 = vmul.f32 %v382, 0.01
  %v387 = vmax.f32 %v379, %v385
  %v388 = vmax.f32 %v382, %v386
  %v389 = vpack.c.bf16 %v388, %v387
  %v390 = vld [vmem:[%s2] sm:$0xf]
  %v391 = vld [vmem:[%s2 + $0x4] sm:$0xf]
  %v392 = vld [vmem:[%s2 + $0x8] sm:$0xf]
  %v393 = vld [vmem:[%s2 + $0xc] sm:$0xf]
  %v394 = vld [vmem:[%s2 + $0x10] sm:$0xf]
  %v395 = vld [vmem:[%s2 + $0x14] sm:$0xf]
  %v396 = vld [vmem:[%s2 + $0x18] sm:$0xf]
  %v397 = vld [vmem:[%s2 + $0x1c] sm:$0xf]
  %v398 = vld [vmem:[%s2 + $0x20] sm:$0xf]
  %v399 = vld [vmem:[%s2 + $0x24] sm:$0xf]
  %v400 = vld [vmem:[%s2 + $0x28] sm:$0xf]
  %v401 = vld [vmem:[%s2 + $0x2c] sm:$0xf]
  %v402 = vld [vmem:[%s2 + $0x30] sm:$0xf]
  %v403 = vld [vmem:[%s2 + $0x34] sm:$0xf]
  %v404 = vld [vmem:[%s2 + $0x38] sm:$0xf]
  %v405 = vld [vmem:[%s2 + $0x3c] sm:$0xf]
  %v406 = vlaneseq
  %v407 = vshrl.u32 %v406, 7
  %v408 = vsub.s32 1, %v407
  %v409 = vrot.slane %v18, %v408
  %v426 = vunpack.c.l.b16 %v390
  %v427 = vunpack.c.l.b16 %v391
  %v428 = vunpack.c.l.b16 %v392
  %v429 = vunpack.c.l.b16 %v393
  %v430 = vunpack.c.l.b16 %v394
  %v431 = vunpack.c.l.b16 %v395
  %v432 = vunpack.c.l.b16 %v396
  %v433 = vunpack.c.l.b16 %v397
  %v434 = vunpack.c.l.b16 %v398
  %v435 = vunpack.c.l.b16 %v399
  %v436 = vunpack.c.l.b16 %v400
  %v437 = vunpack.c.l.b16 %v401
  %v438 = vunpack.c.l.b16 %v402
  %v439 = vunpack.c.l.b16 %v403
  %v440 = vunpack.c.l.b16 %v404
  %v441 = vunpack.c.l.b16 %v405
  %v442 = vpack.c.b16 %v427, %v426
  %v443 = vpack.c.b16 %v429, %v428
  %v444 = vpack.c.b16 %v431, %v430
  %v445 = vpack.c.b16 %v433, %v432
  %v446 = vpack.c.b16 %v435, %v434
  %v447 = vpack.c.b16 %v437, %v436
  %v448 = vpack.c.b16 %v439, %v438
  %v449 = vpack.c.b16 %v441, %v440
  %458 = vmatprep.subr.bf16.mxu0 0
  %459 = vmatpush1.bf16.msra.mxu0 %v449
  %460 = vmatprep.subr.bf16.mxu0 0
  %461 = vmatpush1.bf16.msra.mxu0 %v448
  %462 = vmatprep.subr.bf16.mxu0 0
  %463 = vmatpush1.bf16.msra.mxu0 %v447
  %464 = vmatprep.subr.bf16.mxu0 0
  %465 = vmatpush1.bf16.msra.mxu0 %v446
  %466 = vmatprep.subr.bf16.mxu0 0
  %467 = vmatpush1.bf16.msra.mxu0 %v445
  %468 = vmatprep.subr.bf16.mxu0 0
  %469 = vmatpush1.bf16.msra.mxu0 %v444
  %470 = vmatprep.subr.bf16.mxu0 0
  %471 = vmatpush1.bf16.msra.mxu0 %v443
  %472 = vmatprep.subr.bf16.mxu0 0
  %473 = vmatpush1.bf16.msra.mxu0 %v442
  %474 = vmatprep.subr.bf16.mxu0 0
  %475 = vmatpush2.bf16.msra.mxu0 0
  %476 = vmatprep.subr.bf16.mxu0 0
  %477 = vmatpush2.bf16.msra.mxu0 0
  %478 = vmatprep.subr.bf16.mxu0 0
  %479 = vmatpush2.bf16.msra.mxu0 0
  %480 = vmatprep.subr.bf16.mxu0 0
  %481 = vmatpush2.bf16.msra.mxu0 0
  %482 = vmatprep.subr.bf16.mxu0 0
  %483 = vmatpush2.bf16.msra.mxu0 0
  %484 = vmatprep.subr.bf16.mxu0 0
  %485 = vmatpush2.bf16.msra.mxu0 0
  %486 = vmatprep.subr.bf16.mxu0 0
  %487 = vmatpush2.bf16.msra.mxu0 0
  %488 = vmatprep.subr.bf16.mxu0 0
  %489 = vmatpush2.bf16.msra.mxu0 0
  %490 = vmatprep.mubr.bf16.mxu0 0
  %491 = vmatmul.mubr.bf16.gmra.mxu0 %v389
  %v492 = vpop.f32.mrf.mxu0
  %v493 = vadd.f32 %v409, %v492
  %v494 = vpop.f32.mrf.mxu0
  %v495 = vpop.f32.mrf.mxu0
  %v496 = vadd.f32 %v409, %v495
  %v497 = vpop.f32.mrf.mxu0
  %498 = vdwg.mxu0
  %v499 = vmul.f32 %v493, 0.01
  %v500 = vmul.f32 %v496, 0.01
  %v501 = vmax.f32 %v493, %v499
  %v502 = vmax.f32 %v496, %v500
  %v503 = vpack.c.bf16 %v502, %v501
  %s504 = scalar_lea.vmem %s2, 64
  %v505 = vld [vmem:[%s504] sm:$0xf]
  %v506 = vld [vmem:[%s504 + $0x4] sm:$0xf]
  %v507 = vld [vmem:[%s504 + $0x8] sm:$0xf]
  %v508 = vld [vmem:[%s504 + $0xc] sm:$0xf]
  %v509 = vld [vmem:[%s504 + $0x10] sm:$0xf]
  %v510 = vld [vmem:[%s504 + $0x14] sm:$0xf]
  %v511 = vld [vmem:[%s504 + $0x18] sm:$0xf]
  %v512 = vld [vmem:[%s504 + $0x1c] sm:$0xf]
  %v513 = vld [vmem:[%s504 + $0x20] sm:$0xf]
  %v514 = vld [vmem:[%s504 + $0x24] sm:$0xf]
  %v515 = vld [vmem:[%s504 + $0x28] sm:$0xf]
  %v516 = vld [vmem:[%s504 + $0x2c] sm:$0xf]
  %v517 = vld [vmem:[%s504 + $0x30] sm:$0xf]
  %v518 = vld [vmem:[%s504 + $0x34] sm:$0xf]
  %v519 = vld [vmem:[%s504 + $0x38] sm:$0xf]
  %v520 = vld [vmem:[%s504 + $0x3c] sm:$0xf]
  %v521 = vlaneseq
  %v522 = vshrl.u32 %v521, 7
  %v523 = vsub.s32 2, %v522
  %v524 = vrot.slane %v18, %v523
  %v541 = vunpack.c.l.b16 %v505
  %v542 = vunpack.c.l.b16 %v506
  %v543 = vunpack.c.l.b16 %v507
  %v544 = vunpack.c.l.b16 %v508
  %v545 = vunpack.c.l.b16 %v509
  %v546 = vunpack.c.l.b16 %v510
  %v547 = vunpack.c.l.b16 %v511
  %v548 = vunpack.c.l.b16 %v512
  %v549 = vunpack.c.l.b16 %v513
  %v550 = vunpack.c.l.b16 %v514
  %v551 = vunpack.c.l.b16 %v515
  %v552 = vunpack.c.l.b16 %v516
  %v553 = vunpack.c.l.b16 %v517
  %v554 = vunpack.c.l.b16 %v518
  %v555 = vunpack.c.l.b16 %v519
  %v556 = vunpack.c.l.b16 %v520
  %v557 = vpack.c.b16 %v542, %v541
  %v558 = vpack.c.b16 %v544, %v543
  %v559 = vpack.c.b16 %v546, %v545
  %v560 = vpack.c.b16 %v548, %v547
  %v561 = vpack.c.b16 %v550, %v549
  %v562 = vpack.c.b16 %v552, %v551
  %v563 = vpack.c.b16 %v554, %v553
  %v564 = vpack.c.b16 %v556, %v555
  %573 = vmatprep.subr.bf16.mxu0 0
  %574 = vmatpush1.bf16.msra.mxu0 %v564
  %575 = vmatprep.subr.bf16.mxu0 0
  %576 = vmatpush1.bf16.msra.mxu0 %v563
  %577 = vmatprep.subr.bf16.mxu0 0
  %578 = vmatpush1.bf16.msra.mxu0 %v562
  %579 = vmatprep.subr.bf16.mxu0 0
  %580 = vmatpush1.bf16.msra.mxu0 %v561
  %581 = vmatprep.subr.bf16.mxu0 0
  %582 = vmatpush1.bf16.msra.mxu0 %v560
  %583 = vmatprep.subr.bf16.mxu0 0
  %584 = vmatpush1.bf16.msra.mxu0 %v559
  %585 = vmatprep.subr.bf16.mxu0 0
  %586 = vmatpush1.bf16.msra.mxu0 %v558
  %587 = vmatprep.subr.bf16.mxu0 0
  %588 = vmatpush1.bf16.msra.mxu0 %v557
  %589 = vmatprep.subr.bf16.mxu0 0
  %590 = vmatpush2.bf16.msra.mxu0 0
  %591 = vmatprep.subr.bf16.mxu0 0
  %592 = vmatpush2.bf16.msra.mxu0 0
  %593 = vmatprep.subr.bf16.mxu0 0
  %594 = vmatpush2.bf16.msra.mxu0 0
  %595 = vmatprep.subr.bf16.mxu0 0
  %596 = vmatpush2.bf16.msra.mxu0 0
  %597 = vmatprep.subr.bf16.mxu0 0
  %598 = vmatpush2.bf16.msra.mxu0 0
  %599 = vmatprep.subr.bf16.mxu0 0
  %600 = vmatpush2.bf16.msra.mxu0 0
  %601 = vmatprep.subr.bf16.mxu0 0
  %602 = vmatpush2.bf16.msra.mxu0 0
  %603 = vmatprep.subr.bf16.mxu0 0
  %604 = vmatpush2.bf16.msra.mxu0 0
  %605 = vmatprep.mubr.bf16.mxu0 0
  %606 = vmatmul.mubr.bf16.gmra.mxu0 %v503
  %v607 = vpop.f32.mrf.mxu0
  %v608 = vadd.f32 %v524, %v607
  %v609 = vpop.f32.mrf.mxu0
  %v610 = vpop.f32.mrf.mxu0
  %v611 = vadd.f32 %v524, %v610
  %v612 = vpop.f32.mrf.mxu0
  %613 = vdwg.mxu0
  %v614 = vmul.f32 %v608, 0.01
  %v615 = vmul.f32 %v611, 0.01
  %v616 = vmax.f32 %v608, %v614
  %v617 = vmax.f32 %v611, %v615
  %v618 = vpack.c.bf16 %v617, %v616
  %s619 = scalar_lea.vmem %s2, 128
  %v620 = vld [vmem:[%s619] sm:$0xf]
  %v621 = vld [vmem:[%s619 + $0x4] sm:$0xf]
  %v622 = vld [vmem:[%s619 + $0x8] sm:$0xf]
  %v623 = vld [vmem:[%s619 + $0xc] sm:$0xf]
  %v624 = vld [vmem:[%s619 + $0x10] sm:$0xf]
  %v625 = vld [vmem:[%s619 + $0x14] sm:$0xf]
  %v626 = vld [vmem:[%s619 + $0x18] sm:$0xf]
  %v627 = vld [vmem:[%s619 + $0x1c] sm:$0xf]
  %v628 = vld [vmem:[%s619 + $0x20] sm:$0xf]
  %v629 = vld [vmem:[%s619 + $0x24] sm:$0xf]
  %v630 = vld [vmem:[%s619 + $0x28] sm:$0xf]
  %v631 = vld [vmem:[%s619 + $0x2c] sm:$0xf]
  %v632 = vld [vmem:[%s619 + $0x30] sm:$0xf]
  %v633 = vld [vmem:[%s619 + $0x34] sm:$0xf]
  %v634 = vld [vmem:[%s619 + $0x38] sm:$0xf]
  %v635 = vld [vmem:[%s619 + $0x3c] sm:$0xf]
  %v636 = vlaneseq
  %v637 = vshrl.u32 %v636, 7
  %v638 = vsub.s32 3, %v637
  %v639 = vrot.slane %v18, %v638
  %v656 = vunpack.c.l.b16 %v620
  %v657 = vunpack.c.l.b16 %v621
  %v658 = vunpack.c.l.b16 %v622
  %v659 = vunpack.c.l.b16 %v623
  %v660 = vunpack.c.l.b16 %v624
  %v661 = vunpack.c.l.b16 %v625
  %v662 = vunpack.c.l.b16 %v626
  %v663 = vunpack.c.l.b16 %v627
  %v664 = vunpack.c.l.b16 %v628
  %v665 = vunpack.c.l.b16 %v629
  %v666 = vunpack.c.l.b16 %v630
  %v667 = vunpack.c.l.b16 %v631
  %v668 = vunpack.c.l.b16 %v632
  %v669 = vunpack.c.l.b16 %v633
  %v670 = vunpack.c.l.b16 %v634
  %v671 = vunpack.c.l.b16 %v635
  %v672 = vpack.c.b16 %v657, %v656
  %v673 = vpack.c.b16 %v659, %v658
  %v674 = vpack.c.b16 %v661, %v660
  %v675 = vpack.c.b16 %v663, %v662
  %v676 = vpack.c.b16 %v665, %v664
  %v677 = vpack.c.b16 %v667, %v666
  %v678 = vpack.c.b16 %v669, %v668
  %v679 = vpack.c.b16 %v671, %v670
  %688 = vmatprep.subr.bf16.mxu0 0
  %689 = vmatpush1.bf16.msra.mxu0 %v679
  %690 = vmatprep.subr.bf16.mxu0 0
  %691 = vmatpush1.bf16.msra.mxu0 %v678
  %692 = vmatprep.subr.bf16.mxu0 0
  %693 = vmatpush1.bf16.msra.mxu0 %v677
  %694 = vmatprep.subr.bf16.mxu0 0
  %695 = vmatpush1.bf16.msra.mxu0 %v676
  %696 = vmatprep.subr.bf16.mxu0 0
  %697 = vmatpush1.bf16.msra.mxu0 %v675
  %698 = vmatprep.subr.bf16.mxu0 0
  %699 = vmatpush1.bf16.msra.mxu0 %v674
  %700 = vmatprep.subr.bf16.mxu0 0
  %701 = vmatpush1.bf16.msra.mxu0 %v673
  %702 = vmatprep.subr.bf16.mxu0 0
  %703 = vmatpush1.bf16.msra.mxu0 %v672
  %704 = vmatprep.subr.bf16.mxu0 0
  %705 = vmatpush2.bf16.msra.mxu0 0
  %706 = vmatprep.subr.bf16.mxu0 0
  %707 = vmatpush2.bf16.msra.mxu0 0
  %708 = vmatprep.subr.bf16.mxu0 0
  %709 = vmatpush2.bf16.msra.mxu0 0
  %710 = vmatprep.subr.bf16.mxu0 0
  %711 = vmatpush2.bf16.msra.mxu0 0
  %712 = vmatprep.subr.bf16.mxu0 0
  %713 = vmatpush2.bf16.msra.mxu0 0
  %714 = vmatprep.subr.bf16.mxu0 0
  %715 = vmatpush2.bf16.msra.mxu0 0
  %716 = vmatprep.subr.bf16.mxu0 0
  %717 = vmatpush2.bf16.msra.mxu0 0
  %718 = vmatprep.subr.bf16.mxu0 0
  %719 = vmatpush2.bf16.msra.mxu0 0
  %720 = vmatprep.mubr.bf16.mxu0 0
  %721 = vmatmul.mubr.bf16.gmra.mxu0 %v618
  %v722 = vpop.f32.mrf.mxu0
  %v723 = vadd.f32 %v639, %v722
  %v724 = vpop.f32.mrf.mxu0
  %v725 = vpop.f32.mrf.mxu0
  %v726 = vadd.f32 %v639, %v725
  %v727 = vpop.f32.mrf.mxu0
  %728 = vdwg.mxu0
  %v729 = vpack.c.bf16 %v726, %v723
  %v731 = vunpack.c.l.b16 %v729
  %v732 = vunpack.c.h.b16 %v729
  %v733 = vpack.c.b16 %v731, %v731
  %v734 = vpack.c.b16 %v732, %v732
  %737 = vst [vmem:[%s4] sm:$0xf] %v733
  %738 = vst [vmem:[%s4 + $0x4] sm:$0xf] %v734
  // Predicated region
  $region18: #{simple_forward.1} parent=0 // pred_check
    _
  $region19: #{simple_forward.1} parent=0 // pred_check_branch
    %740 = sbr.rel (0) target = $region21
  $region20: #{simple_forward.1} parent=0 // pred_region
    _
  $region21: #{simple_forward.1} parent=0 // pred_fallthru
    _
  // Predicated region
  $region22: #{simple_forward.1} parent=0 // pred_check
    _
  $region23: #{simple_forward.1} parent=0 // pred_check_branch
    %742 = sbr.rel (0) target = $region25
  $region24: #{simple_forward.1} parent=0 // pred_region
    _
  $region25: #{simple_forward.1} parent=0 // pred_fallthru
    _

</llo_original>
